<compile_context>
chip_gen: v7x
topology: tpu7x:2x2x1
jax: 0.10.0
libtpu: 0.0.40
codegen_flags: <defaults>
</compile_context>

<pallas_src>
import functools

import jax
import jax.numpy as jnp
from jax.experimental import pallas as pl
from jax.experimental.pallas import tpu as pltpu

BN_EPS = 1e-5


def _branch_kernel(x_ref, w_ref, gamma_ref, beta_ref, o_ref, *,
                   has_skip_mm, matmul_dtype):
    """One branch (primary / secondary) per grid step.

    x_ref     : (1, B, Cin, L)   input, NCL; channels on sublanes, L on lanes
    w_ref     : (1, M, 3*Cin)    fused weight; rows [0:Cout] = conv taps
                                 [x[l-1] | x[l] | x[l+1]]; rows [Cout:2*Cout]
                                 = 1x1 skip conv in the centre block (only when
                                 has_skip_mm)
    gamma_ref : (1, Cout, 1)     BN scale
    beta_ref  : (1, Cout, 1)     BN shift
    o_ref     : (1, B, Cout, L)  output, NCL (lane-dense: last dim = L)
    """
    x = x_ref[0].astype(jnp.float32)                      # (B, Cin, L)
    B, Cin, L = x.shape
    Cout = o_ref.shape[2]
    w_mm = w_ref[0].astype(matmul_dtype)                  # (M, 3*Cin), hoisted

    # Lane-index masks for the two boundary columns of the "same" convolution.
    lane = jax.lax.broadcasted_iota(jnp.int32, (Cin, L), 1)
    has_left = lane >= 1                                  # l-1 exists
    has_right = lane <= L - 2                             # l+1 exists

    # Pass 1: conv (+ fused 1x1 skip) as one matmul per batch row (B is static
    # -> unrolled), accumulating per-channel BN statistics on the fly.
    ys = []
    s = jnp.zeros((Cout, 1), jnp.float32)
    ss = jnp.zeros((Cout, 1), jnp.float32)
    for b in range(B):
        xb = x[b]                                                        # (Cin, L)
        x_m1 = jnp.where(has_left, pltpu.roll(xb, shift=1, axis=1), 0.0)       # x[l-1]
        x_p1 = jnp.where(has_right, pltpu.roll(xb, shift=L - 1, axis=1), 0.0)  # x[l+1]
        xs_b = jnp.concatenate([x_m1, xb, x_p1], axis=0)                 # (3*Cin, L)
        y_b = jax.lax.dot_general(
            w_mm, xs_b.astype(matmul_dtype),
            dimension_numbers=(((1,), (0,)), ((), ())),
            preferred_element_type=jnp.float32)                          # (M, L)
        conv_b = y_b[:Cout, :] if has_skip_mm else y_b                   # (Cout, L)
        s = s + jnp.sum(conv_b, axis=1, keepdims=True)
        ss = ss + jnp.sum(conv_b * conv_b, axis=1, keepdims=True)
        ys.append(y_b)

    # BatchNorm1d, train mode: biased stats over (batch, length), single pass.
    inv_n = 1.0 / float(B * L)
    mean = s * inv_n                                      # (Cout, 1)
    var = jnp.maximum(ss * inv_n - mean * mean, 0.0)
    inv_std = jax.lax.rsqrt(var + BN_EPS)
    scale = gamma_ref[0] * inv_std                        # (Cout, 1)
    shift = beta_ref[0] - mean * scale

    # Pass 2: normalize + ReLU (Dropout p=0.0 is a no-op) + skip, store.
    for b in range(B):
        y_b = ys[b]
        conv_b = y_b[:Cout, :] if has_skip_mm else y_b
        act = jnp.maximum(conv_b * scale + shift, 0.0)
        skip = y_b[Cout:, :] if has_skip_mm else x[b]     # identity skip: + x
        o_ref[0, b] = (act + skip).astype(o_ref.dtype)


def _fused_weights(params, Cin, Cout, has_skip):
    """Build per-branch (M, 3*Cin) fused weights and (2, Cout, 1) BN params."""
    def one(w_conv, w_skip):
        # (Cout, Cin, 3) -> (Cout, 3*Cin), tap-major column blocks.
        wf = jnp.transpose(w_conv, (0, 2, 1)).reshape(Cout, 3 * Cin)
        if not has_skip:
            return wf
        z = jnp.zeros((Cout, Cin), jnp.float32)
        skip_rows = jnp.concatenate([z, w_skip, z], axis=1)   # centre-tap block
        return jnp.concatenate([wf, skip_rows], axis=0)       # (2*Cout, 3*Cin)

    w = jnp.stack([one(params["w1"], params["wskip1"]),
                   one(params["w2"], params["wskip2"])], axis=0)
    gamma = jnp.stack([params["gamma1"], params["gamma2"]])[:, :, None]
    beta = jnp.stack([params["beta1"], params["beta2"]])[:, :, None]
    return w, gamma, beta


@functools.partial(jax.jit, static_argnames=("matmul_dtype",))
def mmcnn_encoder_layer(x1, x2, params, matmul_dtype=jnp.float32):
    """Forward of MMCNNEncoderLayer.  x1, x2: (B, Cin, L) float32 (NCL)."""
    B, Cin, L = x1.shape
    Cout = params["gamma1"].shape[0]
    has_skip = params["wskip1"] is not None      # input_size != output_size
    M = 2 * Cout if has_skip else Cout

    x = jnp.stack([x1, x2], axis=0).astype(jnp.float32)   # (2, B, Cin, L)
    w, gamma, beta = _fused_weights(params, Cin, Cout, has_skip)

    # Rough VMEM footprint (double-buffered blocks + in-kernel temporaries).
    est = 4 * (6 * B * Cin * L + 4 * B * Cout * L + 2 * B * M * L
               + 4 * M * 3 * Cin) + (2 << 20)
    vmem_limit = int(min(max(est, 16 << 20), 48 << 20))   # stay under v7x's 64 MiB

    kernel = functools.partial(_branch_kernel, has_skip_mm=has_skip,
                               matmul_dtype=matmul_dtype)

    out = pl.pallas_call(
        kernel,
        out_shape=jax.ShapeDtypeStruct((2, B, Cout, L), jnp.float32),
        grid=(2,),                                        # one branch per grid step
        in_specs=[
            pl.BlockSpec((1, B, Cin, L), lambda i: (i, 0, 0, 0)),
            pl.BlockSpec((1, M, 3 * Cin), lambda i: (i, 0, 0)),
            pl.BlockSpec((1, Cout, 1), lambda i: (i, 0, 0)),
            pl.BlockSpec((1, Cout, 1), lambda i: (i, 0, 0)),
        ],
        out_specs=pl.BlockSpec((1, B, Cout, L), lambda i: (i, 0, 0, 0)),
        compiler_params=pltpu.CompilerParams(
            dimension_semantics=("parallel",),            # v7x: one TC per branch
            vmem_limit_bytes=vmem_limit),
    )(x, w, gamma, beta)
    return out[0], out[1]


# ----------------------- deterministic parameter init -----------------------
def init_params(key, input_size, output_size):
    """Parameters in PyTorch layout (conv: (Cout, Cin, 3), skip: (Cout, Cin))."""
    k1, k2, k3, k4 = jax.random.split(key, 4)

    def xavier_conv3(k):
        fan_in, fan_out = input_size * 3, output_size * 3
        bound = (6.0 / (fan_in + fan_out)) ** 0.5
        return jax.random.uniform(k, (output_size, input_size, 3),
                                  jnp.float32, -bound, bound)

    def skip_conv1(k):
        if input_size == output_size:
            return None                      # skipconv is None -> identity skip
        bound = (1.0 / input_size) ** 0.5
        w = jax.random.uniform(k, (output_size, input_size, 1),
                               jnp.float32, -bound, bound)
        return w[:, :, 0]                    # (Cout, Cin)

    return {
        "w1": xavier_conv3(k1), "w2": xavier_conv3(k2),
        "gamma1": jnp.ones((output_size,), jnp.float32),
        "beta1": jnp.zeros((output_size,), jnp.float32),
        "gamma2": jnp.ones((output_size,), jnp.float32),
        "beta2": jnp.zeros((output_size,), jnp.float32),
        "wskip1": skip_conv1(k3), "wskip2": skip_conv1(k4),
    }


# ----------------------------- pure-JAX reference ----------------------------
def _ref_branch(x, w_conv, gamma, beta, w_skip, matmul_dtype=jnp.float32):
    dt = matmul_dtype
    y = jax.lax.conv_general_dilated(
        x.astype(dt), w_conv.astype(dt), window_strides=(1,), padding=((1, 1),),
        dimension_numbers=("NCH", "OIH", "NCH"),
        preferred_element_type=jnp.float32)
    mean = y.mean(axis=(0, 2), keepdims=True)
    var = ((y - mean) ** 2).mean(axis=(0, 2), keepdims=True)
    y = (y - mean) / jnp.sqrt(var + BN_EPS)
    y = y * gamma[None, :, None] + beta[None, :, None]
    y = jnp.maximum(y, 0.0)
    if w_skip is None:
        skip = x
    else:
        skip = jax.lax.conv_general_dilated(
            x.astype(dt), w_skip[:, :, None].astype(dt), window_strides=(1,),
            padding=((0, 0),), dimension_numbers=("NCH", "OIH", "NCH"),
            preferred_element_type=jnp.float32)
    return y + skip


def _check(out, ref, atol, rtol, name):
    err = float(jnp.max(jnp.abs(out - ref)))
    assert bool(jnp.allclose(out, ref, atol=atol, rtol=rtol)), \
        f"{name}: max abs err {err}"


if __name__ == "__main__":
    key = jax.random.PRNGKey(0)
    kx1, kx2, kpA, kpB = jax.random.split(key, 4)
    B, L = 2, 128

    # ---- Config A: input_size != output_size -> 1x1 skip conv fused in matmul
    CinA, CoutA = 8, 16
    x1 = jax.random.normal(kx1, (B, CinA, L), jnp.float32)
    x2 = jax.random.normal(kx2, (B, CinA, L), jnp.float32)
    pA = init_params(kpA, CinA, CoutA)

    o1, o2 = mmcnn_encoder_layer(x1, x2, pA)              # f32 MXU-operand path
    jax.block_until_ready((o1, o2))
    assert o1.shape == (B, CoutA, L) and o2.shape == (B, CoutA, L)
    _check(o1, _ref_branch(x1, pA["w1"], pA["gamma1"], pA["beta1"], pA["wskip1"]),
           2e-4, 2e-4, "A/primary/f32")
    _check(o2, _ref_branch(x2, pA["w2"], pA["gamma2"], pA["beta2"], pA["wskip2"]),
           2e-4, 2e-4, "A/secondary/f32")

    # bf16 MXU-operand fast path (f32 accumulation, f32 BN / ReLU math)
    o1b, o2b = mmcnn_encoder_layer(x1, x2, pA, matmul_dtype=jnp.bfloat16)
    jax.block_until_ready((o1b, o2b))
    _check(o1b, _ref_branch(x1, pA["w1"], pA["gamma1"], pA["beta1"], pA["wskip1"],
                            jnp.bfloat16), 2e-3, 2e-3, "A/primary/bf16")
    _check(o2b, _ref_branch(x2, pA["w2"], pA["gamma2"], pA["beta2"], pA["wskip2"],
                            jnp.bfloat16), 2e-3, 2e-3, "A/secondary/bf16")

    # ---- Config B: input_size == output_size -> identity skip (no skip matmul)
    CinB = CoutB = 16
    x1b = jax.random.normal(jax.random.fold_in(kx1, 1), (B, CinB, L), jnp.float32)
    x2b = jax.random.normal(jax.random.fold_in(kx2, 1), (B, CinB, L), jnp.float32)
    pB = init_params(kpB, CinB, CoutB)

    q1, q2 = mmcnn_encoder_layer(x1b, x2b, pB)
    jax.block_until_ready((q1, q2))
    _check(q1, _ref_branch(x1b, pB["w1"], pB["gamma1"], pB["beta1"], pB["wskip1"]),
           2e-4, 2e-4, "B/primary/f32")
    _check(q2, _ref_branch(x2b, pB["w2"], pB["gamma2"], pB["beta2"], pB["wskip2"]),
           2e-4, 2e-4, "B/secondary/f32")

    print("KERNEL_OK")
</pallas_src>

<mosaic_0001>
module attributes {stable_mosaic.version = 11 : i64} {
  func.func @_branch_kernel(%arg0: i32, %arg1: memref<1x2x8x128xf32, #tpu.memory_space<vmem>>, %arg2: memref<1x32x24xf32, #tpu.memory_space<vmem>>, %arg3: memref<1x16x1xf32, #tpu.memory_space<vmem>>, %arg4: memref<1x16x1xf32, #tpu.memory_space<vmem>>, %arg5: memref<1x2x16x128xf32, #tpu.memory_space<vmem>>) attributes {dimension_semantics = [#tpu.dimension_semantics<parallel>], iteration_bounds = array<i64: 2>, scalar_prefetch = 0 : i64, scratch_operands = 0 : i64, tpu.core_type = #tpu.core_type<tc>, window_params = [{transform_indices = @transform_0, window_bounds = array<i64: 1, 2, 8, 128>}, {transform_indices = @transform_1, window_bounds = array<i64: 1, 32, 24>}, {transform_indices = @transform_2, window_bounds = array<i64: 1, 16, 1>}, {transform_indices = @transform_3, window_bounds = array<i64: 1, 16, 1>}, {transform_indices = @transform_4, window_bounds = array<i64: 1, 2, 16, 128>}]} {
    %c0 = arith.constant 0 : index
    %c0_0 = arith.constant 0 : index
    %c0_1 = arith.constant 0 : index
    %c0_2 = arith.constant 0 : index
    %0 = vector.load %arg1[%c0, %c0_0, %c0_1, %c0_2] : memref<1x2x8x128xf32, #tpu.memory_space<vmem>>, vector<1x2x8x128xf32>
    %1 = vector.shape_cast %0 : vector<1x2x8x128xf32> to vector<2x8x128xf32>
    %c0_3 = arith.constant 0 : index
    %c0_4 = arith.constant 0 : index
    %c0_5 = arith.constant 0 : index
    %2 = vector.load %arg2[%c0_3, %c0_4, %c0_5] : memref<1x32x24xf32, #tpu.memory_space<vmem>>, vector<1x32x24xf32>
    %3 = vector.shape_cast %2 : vector<1x32x24xf32> to vector<32x24xf32>
    %4 = tpu.iota {dimensions = array<i32: 1>} : vector<8x128xi32>
    %c1_i32 = arith.constant 1 : i32
    %5 = vector.broadcast %c1_i32 : i32 to vector<8x128xi32>
    %6 = arith.cmpi sge, %4, %5 : vector<8x128xi32>
    %c126_i32 = arith.constant 126 : i32
    %7 = vector.broadcast %c126_i32 : i32 to vector<8x128xi32>
    %8 = arith.cmpi sle, %4, %7 : vector<8x128xi32>
    %cst = arith.constant 0.000000e+00 : f32
    %9 = vector.broadcast %cst : f32 to vector<16x1xf32>
    %cst_6 = arith.constant 0.000000e+00 : f32
    %10 = vector.broadcast %cst_6 : f32 to vector<16x1xf32>
    %11 = vector.extract_strided_slice %1 {offsets = [0, 0, 0], sizes = [1, 8, 128], strides = [1, 1, 1]} : vector<2x8x128xf32> to vector<1x8x128xf32>
    %12 = vector.shape_cast %11 : vector<1x8x128xf32> to vector<8x128xf32>
    %c1_i32_7 = arith.constant 1 : i32
    %13 = tpu.dynamic_rotate %12 by %c1_i32_7 dim 1 : vector<8x128xf32>, i32 -> vector<8x128xf32>
    %cst_8 = arith.constant 0.000000e+00 : f32
    %14 = vector.broadcast %cst_8 : f32 to vector<8x128xf32>
    %15 = arith.select %6, %13, %14 : vector<8x128xi1>, vector<8x128xf32>
    %c127_i32 = arith.constant 127 : i32
    %16 = tpu.dynamic_rotate %12 by %c127_i32 dim 1 : vector<8x128xf32>, i32 -> vector<8x128xf32>
    %cst_9 = arith.constant 0.000000e+00 : f32
    %17 = vector.broadcast %cst_9 : f32 to vector<8x128xf32>
    %18 = arith.select %8, %16, %17 : vector<8x128xi1>, vector<8x128xf32>
    %19 = tpu.concatenate %15, %12, %18 in 0 : vector<8x128xf32>, vector<8x128xf32>, vector<8x128xf32> -> vector<24x128xf32>
    %cst_10 = arith.constant dense<0.000000e+00> : vector<32x128xf32>
    %20 = tpu.matmul %3, %19, %cst_10 {dimension_numbers = #tpu.dot_dimension_numbers<[1], [0], [0], [1], [0, 0, 1, 1], [], []>} : vector<32x24xf32>, vector<24x128xf32>, vector<32x128xf32> -> vector<32x128xf32>
    %21 = vector.extract_strided_slice %20 {offsets = [0, 0], sizes = [16, 128], strides = [1, 1]} : vector<32x128xf32> to vector<16x128xf32>
    %cst_11 = arith.constant dense<0.000000e+00> : vector<16xf32>
    %22 = vector.multi_reduction <add>, %21, %cst_11 [1] : vector<16x128xf32> to vector<16xf32>
    %23 = vector.shape_cast %22 : vector<16xf32> to vector<16x1xf32>
    %24 = arith.addf %9, %23 : vector<16x1xf32>
    %25 = arith.mulf %21, %21 : vector<16x128xf32>
    %cst_12 = arith.constant dense<0.000000e+00> : vector<16xf32>
    %26 = vector.multi_reduction <add>, %25, %cst_12 [1] : vector<16x128xf32> to vector<16xf32>
    %27 = vector.shape_cast %26 : vector<16xf32> to vector<16x1xf32>
    %28 = arith.addf %10, %27 : vector<16x1xf32>
    %29 = vector.extract_strided_slice %1 {offsets = [1, 0, 0], sizes = [1, 8, 128], strides = [1, 1, 1]} : vector<2x8x128xf32> to vector<1x8x128xf32>
    %30 = vector.shape_cast %29 : vector<1x8x128xf32> to vector<8x128xf32>
    %c1_i32_13 = arith.constant 1 : i32
    %31 = tpu.dynamic_rotate %30 by %c1_i32_13 dim 1 : vector<8x128xf32>, i32 -> vector<8x128xf32>
    %cst_14 = arith.constant 0.000000e+00 : f32
    %32 = vector.broadcast %cst_14 : f32 to vector<8x128xf32>
    %33 = arith.select %6, %31, %32 : vector<8x128xi1>, vector<8x128xf32>
    %c127_i32_15 = arith.constant 127 : i32
    %34 = tpu.dynamic_rotate %30 by %c127_i32_15 dim 1 : vector<8x128xf32>, i32 -> vector<8x128xf32>
    %cst_16 = arith.constant 0.000000e+00 : f32
    %35 = vector.broadcast %cst_16 : f32 to vector<8x128xf32>
    %36 = arith.select %8, %34, %35 : vector<8x128xi1>, vector<8x128xf32>
    %37 = tpu.concatenate %33, %30, %36 in 0 : vector<8x128xf32>, vector<8x128xf32>, vector<8x128xf32> -> vector<24x128xf32>
    %cst_17 = arith.constant dense<0.000000e+00> : vector<32x128xf32>
    %38 = tpu.matmul %3, %37, %cst_17 {dimension_numbers = #tpu.dot_dimension_numbers<[1], [0], [0], [1], [0, 0, 1, 1], [], []>} : vector<32x24xf32>, vector<24x128xf32>, vector<32x128xf32> -> vector<32x128xf32>
    %39 = vector.extract_strided_slice %38 {offsets = [0, 0], sizes = [16, 128], strides = [1, 1]} : vector<32x128xf32> to vector<16x128xf32>
    %cst_18 = arith.constant dense<0.000000e+00> : vector<16xf32>
    %40 = vector.multi_reduction <add>, %39, %cst_18 [1] : vector<16x128xf32> to vector<16xf32>
    %41 = vector.shape_cast %40 : vector<16xf32> to vector<16x1xf32>
    %42 = arith.addf %24, %41 : vector<16x1xf32>
    %43 = arith.mulf %39, %39 : vector<16x128xf32>
    %cst_19 = arith.constant dense<0.000000e+00> : vector<16xf32>
    %44 = vector.multi_reduction <add>, %43, %cst_19 [1] : vector<16x128xf32> to vector<16xf32>
    %45 = vector.shape_cast %44 : vector<16xf32> to vector<16x1xf32>
    %46 = arith.addf %28, %45 : vector<16x1xf32>
    %cst_20 = arith.constant 3.906250e-03 : f32
    %47 = vector.broadcast %cst_20 : f32 to vector<16x1xf32>
    %48 = arith.mulf %42, %47 : vector<16x1xf32>
    %cst_21 = arith.constant 3.906250e-03 : f32
    %49 = vector.broadcast %cst_21 : f32 to vector<16x1xf32>
    %50 = arith.mulf %46, %49 : vector<16x1xf32>
    %51 = arith.mulf %48, %48 : vector<16x1xf32>
    %52 = arith.subf %50, %51 : vector<16x1xf32>
    %cst_22 = arith.constant 0.000000e+00 : f32
    %53 = vector.broadcast %cst_22 : f32 to vector<16x1xf32>
    %54 = arith.maximumf %52, %53 : vector<16x1xf32>
    %cst_23 = arith.constant 9.99999974E-6 : f32
    %55 = vector.broadcast %cst_23 : f32 to vector<16x1xf32>
    %56 = arith.addf %54, %55 : vector<16x1xf32>
    %57 = math.rsqrt %56 : vector<16x1xf32>
    %c0_24 = arith.constant 0 : index
    %c0_25 = arith.constant 0 : index
    %c0_26 = arith.constant 0 : index
    %58 = vector.load %arg3[%c0_24, %c0_25, %c0_26] : memref<1x16x1xf32, #tpu.memory_space<vmem>>, vector<1x16x1xf32>
    %59 = vector.shape_cast %58 : vector<1x16x1xf32> to vector<16x1xf32>
    %60 = arith.mulf %59, %57 : vector<16x1xf32>
    %c0_27 = arith.constant 0 : index
    %c0_28 = arith.constant 0 : index
    %c0_29 = arith.constant 0 : index
    %61 = vector.load %arg4[%c0_27, %c0_28, %c0_29] : memref<1x16x1xf32, #tpu.memory_space<vmem>>, vector<1x16x1xf32>
    %62 = vector.shape_cast %61 : vector<1x16x1xf32> to vector<16x1xf32>
    %63 = arith.mulf %48, %60 : vector<16x1xf32>
    %64 = arith.subf %62, %63 : vector<16x1xf32>
    %65 = vector.extract_strided_slice %20 {offsets = [0, 0], sizes = [16, 128], strides = [1, 1]} : vector<32x128xf32> to vector<16x128xf32>
    %66 = vector.broadcast %60 : vector<16x1xf32> to vector<16x128xf32>
    %67 = arith.mulf %65, %66 : vector<16x128xf32>
    %68 = vector.broadcast %64 : vector<16x1xf32> to vector<16x128xf32>
    %69 = arith.addf %67, %68 : vector<16x128xf32>
    %cst_30 = arith.constant 0.000000e+00 : f32
    %70 = vector.broadcast %cst_30 : f32 to vector<16x128xf32>
    %71 = arith.maximumf %69, %70 : vector<16x128xf32>
    %72 = vector.extract_strided_slice %20 {offsets = [16, 0], sizes = [16, 128], strides = [1, 1]} : vector<32x128xf32> to vector<16x128xf32>
    %73 = arith.addf %71, %72 : vector<16x128xf32>
    %c0_31 = arith.constant 0 : index
    %c0_32 = arith.constant 0 : index
    %c0_33 = arith.constant 0 : index
    %c0_34 = arith.constant 0 : index
    %74 = vector.load %arg5[%c0_31, %c0_32, %c0_33, %c0_34] : memref<1x2x16x128xf32, #tpu.memory_space<vmem>>, vector<1x1x16x128xf32>
    %75 = vector.shape_cast %74 : vector<1x1x16x128xf32> to vector<16x128xf32>
    %76 = vector.shape_cast %73 : vector<16x128xf32> to vector<1x1x16x128xf32>
    tpu.vector_store %arg5[%c0_31, %c0_32, %c0_33, %c0_34], %76 {strides = array<i32>} : memref<1x2x16x128xf32, #tpu.memory_space<vmem>>, vector<1x1x16x128xf32>,
    %77 = vector.extract_strided_slice %38 {offsets = [0, 0], sizes = [16, 128], strides = [1, 1]} : vector<32x128xf32> to vector<16x128xf32>
    %78 = vector.broadcast %60 : vector<16x1xf32> to vector<16x128xf32>
    %79 = arith.mulf %77, %78 : vector<16x128xf32>
    %80 = vector.broadcast %64 : vector<16x1xf32> to vector<16x128xf32>
    %81 = arith.addf %79, %80 : vector<16x128xf32>
    %cst_35 = arith.constant 0.000000e+00 : f32
    %82 = vector.broadcast %cst_35 : f32 to vector<16x128xf32>
    %83 = arith.maximumf %81, %82 : vector<16x128xf32>
    %84 = vector.extract_strided_slice %38 {offsets = [16, 0], sizes = [16, 128], strides = [1, 1]} : vector<32x128xf32> to vector<16x128xf32>
    %85 = arith.addf %83, %84 : vector<16x128xf32>
    %c0_36 = arith.constant 0 : index
    %c1 = arith.constant 1 : index
    %c0_37 = arith.constant 0 : index
    %c0_38 = arith.constant 0 : index
    %86 = vector.load %arg5[%c0_36, %c1, %c0_37, %c0_38] : memref<1x2x16x128xf32, #tpu.memory_space<vmem>>, vector<1x1x16x128xf32>
    %87 = vector.shape_cast %86 : vector<1x1x16x128xf32> to vector<16x128xf32>
    %88 = vector.shape_cast %85 : vector<16x128xf32> to vector<1x1x16x128xf32>
    tpu.vector_store %arg5[%c0_36, %c1, %c0_37, %c0_38], %88 {strides = array<i32>} : memref<1x2x16x128xf32, #tpu.memory_space<vmem>>, vector<1x1x16x128xf32>,
    return
  }
  func.func @transform_0(%arg0: i32) -> (i32, i32, i32, i32) {
    %c0_i32 = arith.constant 0 : i32
    %c0_i32_0 = arith.constant 0 : i32
    %c0_i32_1 = arith.constant 0 : i32
    %c0_i32_2 = arith.constant 0 : i32
    return %arg0, %c0_i32, %c0_i32_0, %c0_i32_1 : i32, i32, i32, i32
  }
  func.func @transform_1(%arg0: i32) -> (i32, i32, i32) {
    %c0_i32 = arith.constant 0 : i32
    %c0_i32_0 = arith.constant 0 : i32
    %c0_i32_1 = arith.constant 0 : i32
    return %arg0, %c0_i32, %c0_i32_0 : i32, i32, i32
  }
  func.func @transform_2(%arg0: i32) -> (i32, i32, i32) {
    %c0_i32 = arith.constant 0 : i32
    %c0_i32_0 = arith.constant 0 : i32
    %c0_i32_1 = arith.constant 0 : i32
    return %arg0, %c0_i32, %c0_i32_0 : i32, i32, i32
  }
  func.func @transform_3(%arg0: i32) -> (i32, i32, i32) {
    %c0_i32 = arith.constant 0 : i32
    %c0_i32_0 = arith.constant 0 : i32
    %c0_i32_1 = arith.constant 0 : i32
    return %arg0, %c0_i32, %c0_i32_0 : i32, i32, i32
  }
  func.func @transform_4(%arg0: i32) -> (i32, i32, i32, i32) {
    %c0_i32 = arith.constant 0 : i32
    %c0_i32_0 = arith.constant 0 : i32
    %c0_i32_1 = arith.constant 0 : i32
    %c0_i32_2 = arith.constant 0 : i32
    return %arg0, %c0_i32, %c0_i32_0, %c0_i32_1 : i32, i32, i32, i32
  }
}

</mosaic_0001>

<llo_original>
// kernel: mmcnn_encoder_layer.1
$region0: #{mmcnn_encoder_layer.1}
  #allocation0 [shape = 'u32[]', space=smem, size = 0x4, offset = 0x4, fixed_abs, tag = 'smem constant byte address 0x4 - core index']
  #allocation1 [shape = 'u32[144,128]{1,0:T(1,128)}', space=vmem, size = 0x12000, scoped, tag = 'internal scratch']
  %s0 = inlined_call_operand.vmem [shape: f32[2,2,8,128], index: 0, kind: input, shape index: {}]
  %s1 = inlined_call_operand.vmem [shape: f32[2,32,24], index: 1, kind: input, shape index: {}]
  %s2 = inlined_call_operand.vmem [shape: f32[2,16,1], index: 2, kind: input, shape index: {}]
  %s3 = inlined_call_operand.vmem [shape: f32[2,16,1], index: 3, kind: input, shape index: {}]
  %s4 = inlined_call_operand.vmem [shape: f32[2,2,16,128], index: 4, kind: output, shape index: {}]
  %s5 = sld [smem:[#allocation0]]
  $region49: #{mmcnn_encoder_layer.1} parent=0
    _
  %s7 = ssub.s32 1, %s5
  %s8 = scalar_select 0, %s7, %s5
  loop: start=0, step=1, limit=4
  $region2: #{mmcnn_encoder_layer.1} parent=0 // loop_pre_header
    _
  $region3: #{mmcnn_encoder_layer.1} parent=0 // loop_header
    %s10 = sphi 0, %s14
    %p11 = scmp.ge.s32.totalorder %s10, 4
    %s20 = sphi 0, %s22
    %s23 = sphi 0, %s20
    %s24 = sphi 0, %s23
    %s40 = sphi 0, %s24
    %s46 = sphi 0, %s48
    %s49 = sphi 0, %s46
    %s50 = sphi 0, %s49
    %s66 = sphi 0, %s50
    %s72 = sphi 0, %s74
    %s75 = sphi 0, %s72
    %s76 = sphi 0, %s75
    %s92 = sphi 0, %s76
    %s98 = sphi 0, %s100
    %s101 = sphi 0, %s98
    %s102 = sphi 0, %s101
    %s118 = sphi 0, %s102
    %s124 = sphi 0, %s126
    %s127 = sphi 0, %s124
    %s128 = sphi 0, %s127
    %s144 = sphi 0, %s128
  $region4: #{mmcnn_encoder_layer.1} parent=0 // loop_header_branch
    %13 = sbr.rel (%p11) target = $region8
  $region5: #{mmcnn_encoder_layer.1} parent=0 // loop_body
    %s15 = ssub.s32 %s10, 1
    %s16 = ssub.s32 %s10, 2
    %s17 = sadd.s32 %s10, 1
    %s18 = ssub.s32 %s10, %s17
    %p19 = scmp.eq.s32.totalorder %s18, 0
    %s21 = sadd.s32 %s20, 1
    %s22 = scalar_select %p19, %s20, %s21
    %p25 = pneg %p19
    %p26 = scmp.eq.s32.totalorder %s10, 1
    %p27 = por %p25, %p26
    %p28 = scmp.ne.s32.totalorder %s20, %s23
    %p29 = scmp.eq.s32.totalorder %s10, 0
    %p30 = por %p28, %p29
    %p31 = scmp.ne.s32.totalorder %s20, %s23
    %p32 = scmp.eq.s32.totalorder %s15, 1
    %p33 = por %p31, %p32
    %p34 = scmp.ne.s32.totalorder %s23, %s24
    %p35 = scmp.eq.s32.totalorder %s15, 0
    %p36 = por %p34, %p35
    %p37 = scmp.ne.s32.totalorder %s23, %s24
    %p38 = scmp.eq.s32.totalorder %s16, 1
    %p39 = por %p37, %p38
    %p41 = scmp.ne.s32.totalorder %s24, %s40
    %p42 = scmp.eq.s32.totalorder %s16, 0
    %p43 = por %p41, %p42
    %s44 = ssub.s32 %s10, %s17
    %p45 = scmp.eq.s32.totalorder %s44, 0
    %s47 = sadd.s32 %s46, 1
    %s48 = scalar_select %p45, %s46, %s47
    %p51 = pneg %p45
    %p52 = scmp.eq.s32.totalorder %s10, 1
    %p53 = por %p51, %p52
    %p54 = scmp.ne.s32.totalorder %s46, %s49
    %p55 = scmp.eq.s32.totalorder %s10, 0
    %p56 = por %p54, %p55
    %p57 = scmp.ne.s32.totalorder %s46, %s49
    %p58 = scmp.eq.s32.totalorder %s15, 1
    %p59 = por %p57, %p58
    %p60 = scmp.ne.s32.totalorder %s49, %s50
    %p61 = scmp.eq.s32.totalorder %s15, 0
    %p62 = por %p60, %p61
    %p63 = scmp.ne.s32.totalorder %s49, %s50
    %p64 = scmp.eq.s32.totalorder %s16, 1
    %p65 = por %p63, %p64
    %p67 = scmp.ne.s32.totalorder %s50, %s66
    %p68 = scmp.eq.s32.totalorder %s16, 0
    %p69 = por %p67, %p68
    %s70 = ssub.s32 %s10, %s17
    %p71 = scmp.eq.s32.totalorder %s70, 0
    %s73 = sadd.s32 %s72, 1
    %s74 = scalar_select %p71, %s72, %s73
    %p77 = pneg %p71
    %p78 = scmp.eq.s32.totalorder %s10, 1
    %p79 = por %p77, %p78
    %p80 = scmp.ne.s32.totalorder %s72, %s75
    %p81 = scmp.eq.s32.totalorder %s10, 0
    %p82 = por %p80, %p81
    %p83 = scmp.ne.s32.totalorder %s72, %s75
    %p84 = scmp.eq.s32.totalorder %s15, 1
    %p85 = por %p83, %p84
    %p86 = scmp.ne.s32.totalorder %s75, %s76
    %p87 = scmp.eq.s32.totalorder %s15, 0
    %p88 = por %p86, %p87
    %p89 = scmp.ne.s32.totalorder %s75, %s76
    %p90 = scmp.eq.s32.totalorder %s16, 1
    %p91 = por %p89, %p90
    %p93 = scmp.ne.s32.totalorder %s76, %s92
    %p94 = scmp.eq.s32.totalorder %s16, 0
    %p95 = por %p93, %p94
    %s96 = ssub.s32 %s10, %s17
    %p97 = scmp.eq.s32.totalorder %s96, 0
    %s99 = sadd.s32 %s98, 1
    %s100 = scalar_select %p97, %s98, %s99
    %p103 = pneg %p97
    %p104 = scmp.eq.s32.totalorder %s10, 1
    %p105 = por %p103, %p104
    %p106 = scmp.ne.s32.totalorder %s98, %s101
    %p107 = scmp.eq.s32.totalorder %s10, 0
    %p108 = por %p106, %p107
    %p109 = scmp.ne.s32.totalorder %s98, %s101
    %p110 = scmp.eq.s32.totalorder %s15, 1
    %p111 = por %p109, %p110
    %p112 = scmp.ne.s32.totalorder %s101, %s102
    %p113 = scmp.eq.s32.totalorder %s15, 0
    %p114 = por %p112, %p113
    %p115 = scmp.ne.s32.totalorder %s101, %s102
    %p116 = scmp.eq.s32.totalorder %s16, 1
    %p117 = por %p115, %p116
    %p119 = scmp.ne.s32.totalorder %s102, %s118
    %p120 = scmp.eq.s32.totalorder %s16, 0
    %p121 = por %p119, %p120
    %s122 = ssub.s32 %s10, %s17
    %p123 = scmp.eq.s32.totalorder %s122, 0
    %s125 = sadd.s32 %s124, 1
    %s126 = scalar_select %p123, %s124, %s125
    %p129 = pneg %p123
    %p130 = scmp.eq.s32.totalorder %s10, 1
    %p131 = por %p129, %p130
    %p132 = scmp.ne.s32.totalorder %s124, %s127
    %p133 = scmp.eq.s32.totalorder %s10, 0
    %p134 = por %p132, %p133
    %p135 = scmp.ne.s32.totalorder %s124, %s127
    %p136 = scmp.eq.s32.totalorder %s15, 1
    %p137 = por %p135, %p136
    %p138 = scmp.ne.s32.totalorder %s127, %s128
    %p139 = scmp.eq.s32.totalorder %s15, 0
    %p140 = por %p138, %p139
    %p141 = scmp.ne.s32.totalorder %s127, %s128
    %p142 = scmp.eq.s32.totalorder %s16, 1
    %p143 = por %p141, %p142
    %p145 = scmp.ne.s32.totalorder %s128, %s144
    %p146 = scmp.eq.s32.totalorder %s16, 0
    %p147 = por %p145, %p146
    %p148 = scmp.le.s32.totalorder 1, %s10
    %p149 = scmp.lt.s32.totalorder %s10, 3
    %p150 = pnand %p148, %p149
    %p151 = pneg %p150
    // Predicated region
    $region9: #{mmcnn_encoder_layer.1} parent=5 // pred_check
      _
    $region10: #{mmcnn_encoder_layer.1} parent=5 // pred_check_branch
      %153 = sbr.rel (%p150) target = $region12
    $region11: #{mmcnn_encoder_layer.1} parent=5 // pred_region
      %s154 = ssub.s32 %s10, 1
    $region12: #{mmcnn_encoder_layer.1} parent=5 // pred_fallthru
      _
    %p155 = scmp.lt.s32.totalorder %s10, 2
    // Predicated region
    $region13: #{mmcnn_encoder_layer.1} parent=5 // pred_check
      %p156 = pneg %p155
    $region14: #{mmcnn_encoder_layer.1} parent=5 // pred_check_branch
      %158 = sbr.rel (%p156) target = $region16
    $region15: #{mmcnn_encoder_layer.1} parent=5 // pred_region
      // Predicated region
      $region17: #{mmcnn_encoder_layer.1} parent=15 // pred_check
        %p159 = pneg %p30
      $region18: #{mmcnn_encoder_layer.1} parent=15 // pred_check_branch
        %161 = sbr.rel (%p159) target = $region20
      $region19: #{mmcnn_encoder_layer.1} parent=15 // pred_region
        %p162 = scmp.lt.s32.totalorder %s10, 1
        %s163 = scalar_select %p162, %s10, 1
        %s164 = smul.addr %s163, 2
        %s165 = smul.addr %s164, 8
        %s166 = scalar_lea.vmem %s0, %s165
      $region20: #{mmcnn_encoder_layer.1} parent=15 // pred_fallthru
        _
      // Predicated region
      $region21: #{mmcnn_encoder_layer.1} parent=15 // pred_check
        %p167 = pneg %p56
      $region22: #{mmcnn_encoder_layer.1} parent=15 // pred_check_branch
        %169 = sbr.rel (%p167) target = $region24
      $region23: #{mmcnn_encoder_layer.1} parent=15 // pred_region
        %p170 = scmp.lt.s32.totalorder %s10, 1
        %s171 = scalar_select %p170, %s10, 1
        %s172 = smul.addr %s171, 4
        %s173 = smul.addr %s172, 8
        %s174 = scalar_lea.vmem %s1, %s173
      $region24: #{mmcnn_encoder_layer.1} parent=15 // pred_fallthru
        _
      // Predicated region
      $region25: #{mmcnn_encoder_layer.1} parent=15 // pred_check
        %p175 = pneg %p82
      $region26: #{mmcnn_encoder_layer.1} parent=15 // pred_check_branch
        %177 = sbr.rel (%p175) target = $region28
      $region27: #{mmcnn_encoder_layer.1} parent=15 // pred_region
        %p178 = scmp.lt.s32.totalorder %s10, 1
        %s179 = scalar_select %p178, %s10, 1
        %s180 = smul.addr %s179, 2
        %s181 = smul.addr %s180, 8
        %s182 = scalar_lea.vmem %s2, %s181
      $region28: #{mmcnn_encoder_layer.1} parent=15 // pred_fallthru
        _
      // Predicated region
      $region29: #{mmcnn_encoder_layer.1} parent=15 // pred_check
        %p183 = pneg %p108
      $region30: #{mmcnn_encoder_layer.1} parent=15 // pred_check_branch
        %185 = sbr.rel (%p183) target = $region32
      $region31: #{mmcnn_encoder_layer.1} parent=15 // pred_region
        %p186 = scmp.lt.s32.totalorder %s10, 1
        %s187 = scalar_select %p186, %s10, 1
        %s188 = smul.addr %s187, 2
        %s189 = smul.addr %s188, 8
        %s190 = scalar_lea.vmem %s3, %s189
      $region32: #{mmcnn_encoder_layer.1} parent=15 // pred_fallthru
        _
    $region16: #{mmcnn_encoder_layer.1} parent=5 // pred_fallthru
      _
    %p191 = scmp.le.s32.totalorder 1, %s10
    %p192 = scmp.lt.s32.totalorder %s10, 3
    %p193 = pnand %p191, %p192
    %p194 = pneg %p193
    // Predicated region
    $region33: #{mmcnn_encoder_layer.1} parent=5 // pred_check
      _
    $region34: #{mmcnn_encoder_layer.1} parent=5 // pred_check_branch
      %196 = sbr.rel (%p193) target = $region36
    $region35: #{mmcnn_encoder_layer.1} parent=5 // pred_region
      %s197 = ssub.s32 %s10, 1
      %p198 = scmp.lt.s32.totalorder %s15, 1
      %s199 = scalar_select %p198, %s15, 1
      %s200 = smul.addr %s199, 2
      %s201 = smul.addr %s200, 8
      %s202 = scalar_lea.vmem %s0, %s201
      %p203 = pneg %p36
      %p204 = pneg %p33
      %p205 = scmp.lt.s32.totalorder %s15, 1
      %s206 = scalar_select %p205, %s15, 1
      %s207 = smul.addr %s206, 4
      %s208 = smul.addr %s207, 8
      %s209 = scalar_lea.vmem %s1, %s208
      %p210 = pneg %p62
      %p211 = pneg %p59
      %p212 = scmp.lt.s32.totalorder %s15, 1
      %s213 = scalar_select %p212, %s15, 1
      %s214 = smul.addr %s213, 2
      %s215 = smul.addr %s214, 8
      %s216 = scalar_lea.vmem %s2, %s215
      %p217 = pneg %p88
      %p218 = pneg %p85
      %p219 = scmp.lt.s32.totalorder %s15, 1
      %s220 = scalar_select %p219, %s15, 1
      %s221 = smul.addr %s220, 2
      %s222 = smul.addr %s221, 8
      %s223 = scalar_lea.vmem %s3, %s222
      %p224 = pneg %p114
      %p225 = pneg %p111
      %p226 = pneg %p140
      %p227 = pneg %p137
      %p228 = scmp.lt.s32.totalorder %s15, 1
      %s229 = scalar_select %p228, %s15, 1
      %s230 = smul.addr %s229, 4
      %s231 = smul.addr %s230, 8
      %s232 = scalar_lea.vmem %s4, %s231
      %p233 = scmp.lt.s32.totalorder %s15, 1
      %s234 = scalar_select %p233, %s15, 1
      %s235 = smul.addr %s234, 2
      %s236 = smul.addr %s235, 8
      %s237 = scalar_lea.vmem %s0, %s236
      %p238 = scmp.lt.s32.totalorder %s15, 1
      %s239 = scalar_select %p238, %s15, 1
      %s240 = smul.addr %s239, 4
      %s241 = smul.addr %s240, 8
      %s242 = scalar_lea.vmem %s1, %s241
      %p243 = scmp.lt.s32.totalorder %s15, 1
      %s244 = scalar_select %p243, %s15, 1
      %s245 = smul.addr %s244, 2
      %s246 = smul.addr %s245, 8
      %s247 = scalar_lea.vmem %s2, %s246
      %p248 = scmp.lt.s32.totalorder %s15, 1
      %s249 = scalar_select %p248, %s15, 1
      %s250 = smul.addr %s249, 2
      %s251 = smul.addr %s250, 8
      %s252 = scalar_lea.vmem %s3, %s251
      %p253 = scmp.lt.s32.totalorder %s15, 1
      %s254 = scalar_select %p253, %s15, 1
      %s255 = smul.addr %s254, 4
      %s256 = smul.addr %s255, 8
      %s257 = scalar_lea.vmem %s4, %s256
      %v258 = vld [vmem:[%s237] sm:$0xff]
      %v259 = vld [vmem:[%s237 + $0x8] sm:$0xff]
      %v260 = vld [vmem:[%s242] sm:$0xff]
      %v261 = vld [vmem:[%s242 + $0x8] sm:$0xff]
      %v262 = vld [vmem:[%s242 + $0x10] sm:$0xff]
      %v263 = vld [vmem:[%s242 + $0x18] sm:$0xff]
      %v264 = vlaneseq
      %v265 = vand.u32 %v264, 127
      %vm266 = vcmp.ge.s32.totalorder %v265, 1
      %vm267 = vcmp.le.s32.totalorder %v265, 126
      %268 = vrot.lane.b32.xlu0 %v258, 1
      %v269 = vpop.permute.xlu0 %268
      %v270 = vsel %vm266, %v269, 0.0
      %271 = vrot.lane.b32.xlu0 %v258, 127
      %v272 = vpop.permute.xlu0 %271
      %v273 = vsel %vm267, %v272, 0.0
      %vm274 = vcmask 195584
      %v276 = vsel %vm274, %v260, 0
      %v279 = vsel %vm274, %v261, 0
      %v282 = vsel %vm274, %v262, 0
      %v285 = vsel %vm274, %v263, 0
      %287 = vmatprep.subr.mxu0 0.0
      %288 = vmatpush1.msra.mxu0 %v270
      %289 = vmatprep.subr.mxu0 0.0
      %290 = vmatpush1.msra.mxu0 %v258
      %291 = vmatprep.subr.mxu0 0.0
      %292 = vmatpush1.msra.mxu0 %v273
      %293 = vmatprep.subr.mxu0 0.0
      %294 = vmatpush1.msra.mxu0 0.0
      %295 = vmatprep.subr.mxu0 0.0
      %296 = vmatpush1.msra.mxu0 0.0
      %297 = vmatprep.subr.mxu0 0.0
      %298 = vmatpush1.msra.mxu0 0.0
      %299 = vmatprep.subr.mxu0 0.0
      %300 = vmatpush1.msra.mxu0 0.0
      %301 = vmatprep.subr.mxu0 0.0
      %302 = vmatpush1.msra.mxu0 0.0
      %303 = vmatprep.subr.mxu0 0.0
      %304 = vmatpush1.msra.mxu0 0.0
      %305 = vmatprep.subr.mxu0 0.0
      %306 = vmatpush1.msra.mxu0 0.0
      %307 = vmatprep.subr.mxu0 0.0
      %308 = vmatpush1.msra.mxu0 0.0
      %309 = vmatprep.subr.mxu0 0.0
      %310 = vmatpush1.msra.mxu0 0.0
      %311 = vmatprep.subr.mxu0 0.0
      %312 = vmatpush1.msra.mxu0 0.0
      %313 = vmatprep.subr.mxu0 0.0
      %314 = vmatpush1.msra.mxu0 0.0
      %315 = vmatprep.subr.mxu0 0.0
      %316 = vmatpush1.msra.mxu0 0.0
      %317 = vmatprep.subr.mxu0 0.0
      %318 = vmatpush1.msra.mxu0 0.0
      %319 = vmatprep.subr.mxu0 0.0
      %320 = vmatpush1.msra.mxu0 0.0
      %321 = vmatprep.subr.mxu0 0.0
      %322 = vmatpush1.msra.mxu0 0.0
      %323 = vmatprep.subr.mxu0 0.0
      %324 = vmatpush1.msra.mxu0 0.0
      %325 = vmatprep.subr.mxu0 0.0
      %326 = vmatpush1.msra.mxu0 0.0
      %327 = vmatprep.subr.mxu0 0.0
      %328 = vmatpush1.msra.mxu0 0.0
      %329 = vmatprep.subr.mxu0 0.0
      %330 = vmatpush1.msra.mxu0 0.0
      %331 = vmatprep.subr.mxu0 0.0
      %332 = vmatpush1.msra.mxu0 0.0
      %333 = vmatprep.subr.mxu0 0.0
      %334 = vmatpush1.msra.mxu0 0.0
      %335 = vmatprep.subr.mxu0 0.0
      %336 = vmatpush1.msra.mxu0 0.0
      %337 = vmatprep.subr.mxu0 0.0
      %338 = vmatpush1.msra.mxu0 0.0
      %339 = vmatprep.subr.mxu0 0.0
      %340 = vmatpush1.msra.mxu0 0.0
      %341 = vmatprep.subr.mxu0 0.0
      %342 = vmatpush1.msra.mxu0 0.0
      %343 = vmatprep.subr.mxu0 0.0
      %344 = vmatpush1.msra.mxu0 0.0
      %345 = vmatprep.subr.mxu0 0.0
      %346 = vmatpush1.msra.mxu0 0.0
      %347 = vmatprep.subr.mxu0 0.0
      %348 = vmatpush1.msra.mxu0 0.0
      %349 = vmatprep.subr.mxu0 0.0
      %350 = vmatpush1.msra.mxu0 0.0
      %351 = vmatprep.mubr.f32.mxu0 0.0
      %352 = vmatmul.mubr.f32.gmra.mrb[0].mxu0 %v276
      %v353 = vpop.f32.mrb[0].mxu0
      %v354 = vadd.f32 0.0, %v353
      %v355 = vpop.f32.mrb[0].mxu0
      %356 = vmatprep.mubr.f32.mxu0 0.0
      %357 = vmatmul.mubr.f32.gmra.mrb[0].mxu0 %v279
      %v358 = vpop.f32.mrb[0].mxu0
      %v359 = vadd.f32 0.0, %v358
      %v360 = vpop.f32.mrb[0].mxu0
      %361 = vmatprep.mubr.f32.mxu0 0.0
      %362 = vmatmul.mubr.f32.gmra.mrb[0].mxu0 %v282
      %v363 = vpop.f32.mrb[0].mxu0
      %v364 = vadd.f32 0.0, %v363
      %v365 = vpop.f32.mrb[0].mxu0
      %366 = vmatprep.mubr.f32.mxu0 0.0
      %367 = vmatmul.mubr.f32.gmra.mrb[0].mxu0 %v285
      %v368 = vpop.f32.mrb[0].mxu0
      %v369 = vadd.f32 0.0, %v368
      %v370 = vpop.f32.mrb[0].mxu0
      %371 = vdwg.mxu0
      %372 = vadd.xlane.f32.xlu0 %v354
      %v373 = vpop.xlane.xlu0 %372
      %374 = vadd.xlane.f32.xlu0 %v359
      %v375 = vpop.xlane.xlu0 %374
      %v376 = vadd.f32 %v373, 0.0
      %v377 = vadd.f32 %v375, 0.0
      %v378 = vmul.f32 %v354, %v354
      %v379 = vmul.f32 %v359, %v359
      %380 = vadd.xlane.f32.xlu0 %v378
      %v381 = vpop.xlane.xlu0 %380
      %382 = vadd.xlane.f32.xlu0 %v379
      %v383 = vpop.xlane.xlu0 %382
      %v384 = vadd.f32 %v381, 0.0
      %v385 = vadd.f32 %v383, 0.0
      %386 = vrot.lane.b32.xlu0 %v259, 1
      %v387 = vpop.permute.xlu0 %386
      %v388 = vsel %vm266, %v387, 0.0
      %389 = vrot.lane.b32.xlu0 %v259, 127
      %v390 = vpop.permute.xlu0 %389
      %v391 = vsel %vm267, %v390, 0.0
      %392 = vmatprep.subr.mxu0 0.0
      %393 = vmatpush1.msra.mxu0 %v388
      %394 = vmatprep.subr.mxu0 0.0
      %395 = vmatpush1.msra.mxu0 %v259
      %396 = vmatprep.subr.mxu0 0.0
      %397 = vmatpush1.msra.mxu0 %v391
      %398 = vmatprep.subr.mxu0 0.0
      %399 = vmatpush1.msra.mxu0 0.0
      %400 = vmatprep.subr.mxu0 0.0
      %401 = vmatpush1.msra.mxu0 0.0
      %402 = vmatprep.subr.mxu0 0.0
      %403 = vmatpush1.msra.mxu0 0.0
      %404 = vmatprep.subr.mxu0 0.0
      %405 = vmatpush1.msra.mxu0 0.0
      %406 = vmatprep.subr.mxu0 0.0
      %407 = vmatpush1.msra.mxu0 0.0
      %408 = vmatprep.subr.mxu0 0.0
      %409 = vmatpush1.msra.mxu0 0.0
      %410 = vmatprep.subr.mxu0 0.0
      %411 = vmatpush1.msra.mxu0 0.0
      %412 = vmatprep.subr.mxu0 0.0
      %413 = vmatpush1.msra.mxu0 0.0
      %414 = vmatprep.subr.mxu0 0.0
      %415 = vmatpush1.msra.mxu0 0.0
      %416 = vmatprep.subr.mxu0 0.0
      %417 = vmatpush1.msra.mxu0 0.0
      %418 = vmatprep.subr.mxu0 0.0
      %419 = vmatpush1.msra.mxu0 0.0
      %420 = vmatprep.subr.mxu0 0.0
      %421 = vmatpush1.msra.mxu0 0.0
      %422 = vmatprep.subr.mxu0 0.0
      %423 = vmatpush1.msra.mxu0 0.0
      %424 = vmatprep.subr.mxu0 0.0
      %425 = vmatpush1.msra.mxu0 0.0
      %426 = vmatprep.subr.mxu0 0.0
      %427 = vmatpush1.msra.mxu0 0.0
      %428 = vmatprep.subr.mxu0 0.0
      %429 = vmatpush1.msra.mxu0 0.0
      %430 = vmatprep.subr.mxu0 0.0
      %431 = vmatpush1.msra.mxu0 0.0
      %432 = vmatprep.subr.mxu0 0.0
      %433 = vmatpush1.msra.mxu0 0.0
      %434 = vmatprep.subr.mxu0 0.0
      %435 = vmatpush1.msra.mxu0 0.0
      %436 = vmatprep.subr.mxu0 0.0
      %437 = vmatpush1.msra.mxu0 0.0
      %438 = vmatprep.subr.mxu0 0.0
      %439 = vmatpush1.msra.mxu0 0.0
      %440 = vmatprep.subr.mxu0 0.0
      %441 = vmatpush1.msra.mxu0 0.0
      %442 = vmatprep.subr.mxu0 0.0
      %443 = vmatpush1.msra.mxu0 0.0
      %444 = vmatprep.subr.mxu0 0.0
      %445 = vmatpush1.msra.mxu0 0.0
      %446 = vmatprep.subr.mxu0 0.0
      %447 = vmatpush1.msra.mxu0 0.0
      %448 = vmatprep.subr.mxu0 0.0
      %449 = vmatpush1.msra.mxu0 0.0
      %450 = vmatprep.subr.mxu0 0.0
      %451 = vmatpush1.msra.mxu0 0.0
      %452 = vmatprep.subr.mxu0 0.0
      %453 = vmatpush1.msra.mxu0 0.0
      %454 = vmatprep.subr.mxu0 0.0
      %455 = vmatpush1.msra.mxu0 0.0
      %456 = vmatprep.mubr.f32.mxu0 0.0
      %457 = vmatmul.mubr.f32.gmra.mrb[0].mxu0 %v276
      %v458 = vpop.f32.mrb[0].mxu0
      %v459 = vadd.f32 0.0, %v458
      %v460 = vpop.f32.mrb[0].mxu0
      %461 = vmatprep.mubr.f32.mxu0 0.0
      %462 = vmatmul.mubr.f32.gmra.mrb[0].mxu0 %v279
      %v463 = vpop.f32.mrb[0].mxu0
      %v464 = vadd.f32 0.0, %v463
      %v465 = vpop.f32.mrb[0].mxu0
      %466 = vmatprep.mubr.f32.mxu0 0.0
      %467 = vmatmul.mubr.f32.gmra.mrb[0].mxu0 %v282
      %v468 = vpop.f32.mrb[0].mxu0
      %v469 = vadd.f32 0.0, %v468
      %v470 = vpop.f32.mrb[0].mxu0
      %471 = vmatprep.mubr.f32.mxu0 0.0
      %472 = vmatmul.mubr.f32.gmra.mrb[0].mxu0 %v285
      %v473 = vpop.f32.mrb[0].mxu0
      %v474 = vadd.f32 0.0, %v473
      %v475 = vpop.f32.mrb[0].mxu0
      %476 = vdwg.mxu0
      %477 = vadd.xlane.f32.xlu0 %v459
      %v478 = vpop.xlane.xlu0 %477
      %479 = vadd.xlane.f32.xlu0 %v464
      %v480 = vpop.xlane.xlu0 %479
      %v481 = vadd.f32 %v376, %v478
      %v482 = vadd.f32 %v377, %v480
      %v483 = vmul.f32 %v459, %v459
      %v484 = vmul.f32 %v464, %v464
      %485 = vadd.xlane.f32.xlu0 %v483
      %v486 = vpop.xlane.xlu0 %485
      %487 = vadd.xlane.f32.xlu0 %v484
      %v488 = vpop.xlane.xlu0 %487
      %v489 = vadd.f32 %v384, %v486
      %v490 = vadd.f32 %v385, %v488
      %v491 = vmul.f32 %v481, 0.00390625
      %v492 = vmul.f32 %v482, 0.00390625
      %v493 = vmul.f32 %v489, 0.00390625
      %v494 = vmul.f32 %v490, 0.00390625
      %v495 = vmul.f32 %v491, %v491
      %v496 = vmul.f32 %v492, %v492
      %v497 = vsub.f32 %v493, %v495
      %v498 = vsub.f32 %v494, %v496
      %v499 = vmax.f32 %v497, 0.0
      %v500 = vmax.f32 %v498, 0.0
      %v501 = vadd.f32 %v499, 1e-05
      %v502 = vadd.f32 %v500, 1e-05
      %v503 = vrsqrt.pop %v501
      %v504 = vrsqrt.pop %v502
      %v505 = vld [vmem:[%s247] sm:$0xff]
      %v506 = vld [vmem:[%s247 + $0x8] sm:$0xff]
      %v507 = vmul.f32 %v505, %v503
      %v508 = vmul.f32 %v506, %v504
      %v509 = vld [vmem:[%s252] sm:$0xff]
      %v510 = vld [vmem:[%s252 + $0x8] sm:$0xff]
      %v511 = vmul.f32 %v491, %v507
      %v512 = vmul.f32 %v492, %v508
      %v513 = vsub.f32 %v509, %v511
      %v514 = vsub.f32 %v510, %v512
      %516 = vset.pattern.permute.xlu0 0
      %517 = vperm.xlu0 %516, %v507
      %v518 = vpop.permute.xlu0 %517
      %521 = vset.pattern.permute.xlu0 0
      %522 = vperm.xlu0 %521, %v508
      %v523 = vpop.permute.xlu0 %522
      %v525 = vmul.f32 %v354, %v518
      %v526 = vmul.f32 %v359, %v523
      %528 = vset.pattern.permute.xlu0 0
      %529 = vperm.xlu0 %528, %v513
      %v530 = vpop.permute.xlu0 %529
      %533 = vset.pattern.permute.xlu0 0
      %534 = vperm.xlu0 %533, %v514
      %v535 = vpop.permute.xlu0 %534
      %v537 = vadd.f32 %v525, %v530
      %v538 = vadd.f32 %v526, %v535
      %v539 = vmax.f32 %v537, 0.0
      %v540 = vmax.f32 %v538, 0.0
      %v541 = vadd.f32 %v539, %v364
      %v542 = vadd.f32 %v540, %v369
      %543 = vst [vmem:[%s257] sm:$0xff] %v541
      %544 = vst [vmem:[%s257 + $0x8] sm:$0xff] %v542
      %v545 = vmul.f32 %v459, %v518
      %v546 = vmul.f32 %v464, %v523
      %v547 = vadd.f32 %v545, %v530
      %v548 = vadd.f32 %v546, %v535
      %v549 = vmax.f32 %v547, 0.0
      %v550 = vmax.f32 %v548, 0.0
      %v551 = vadd.f32 %v549, %v469
      %v552 = vadd.f32 %v550, %v474
      %s553 = scalar_lea.vmem %s257, 16
      %554 = vst [vmem:[%s553] sm:$0xff] %v551
      %555 = vst [vmem:[%s553 + $0x8] sm:$0xff] %v552
      %p556 = scmp.lt.s32.totalorder %s15, 1
      %s557 = scalar_select %p556, %s15, 1
      %s558 = smul.addr %s557, 4
      %s559 = smul.addr %s558, 8
      %s560 = scalar_lea.vmem %s4, %s559
      // Predicated region
      $region37: #{mmcnn_encoder_layer.1} parent=35 // pred_check
        %p561 = pneg %p137
      $region38: #{mmcnn_encoder_layer.1} parent=35 // pred_check_branch
        %563 = sbr.rel (%p561) target = $region40
      $region39: #{mmcnn_encoder_layer.1} parent=35 // pred_region
        _
      $region40: #{mmcnn_encoder_layer.1} parent=35 // pred_fallthru
        _
    $region36: #{mmcnn_encoder_layer.1} parent=5 // pred_fallthru
      _
    %p564 = scmp.le.s32.totalorder 2, %s10
    // Predicated region
    $region41: #{mmcnn_encoder_layer.1} parent=5 // pred_check
      %p565 = pneg %p564
    $region42: #{mmcnn_encoder_layer.1} parent=5 // pred_check_branch
      %567 = sbr.rel (%p565) target = $region44
    $region43: #{mmcnn_encoder_layer.1} parent=5 // pred_region
      %s568 = ssub.s32 %s10, 2
      // Predicated region
      $region45: #{mmcnn_encoder_layer.1} parent=43 // pred_check
        %p569 = pneg %p143
      $region46: #{mmcnn_encoder_layer.1} parent=43 // pred_check_branch
        %571 = sbr.rel (%p569) target = $region48
      $region47: #{mmcnn_encoder_layer.1} parent=43 // pred_region
        %p572 = scmp.lt.s32.totalorder %s16, 1
        %s573 = scalar_select %p572, %s16, 1
        %s574 = smul.addr %s573, 4
        %s575 = smul.addr %s574, 8
        %s576 = scalar_lea.vmem %s4, %s575
      $region48: #{mmcnn_encoder_layer.1} parent=43 // pred_fallthru
        _
    $region44: #{mmcnn_encoder_layer.1} parent=5 // pred_fallthru
      _
  $region6: #{mmcnn_encoder_layer.1} parent=0 // loop_footer
    %s14 = sadd.s32 1, %s10
  $region7: #{mmcnn_encoder_layer.1} parent=0 // loop_footer_branch
    %9 = sbr.rel target = $region3
  $region8: #{mmcnn_encoder_layer.1} parent=0 // loop_exit
    _

</llo_original>
